<compile_context>
chip_gen: v6e
topology: v6e:2x2x1
jax: 0.10.0
libtpu: 0.0.40
codegen_flags: <defaults>
</compile_context>

<pallas_src>
import numpy as np
import jax
import jax.numpy as jnp
from jax.experimental import pallas as pl
from jax.experimental.pallas import tpu as pltpu

_LANE = 128
_SUB = 8
_MAX_TILE_R = 8192                      # 8192 * 128 * 4B = 4 MiB per input per buffer
_ALPHA = 0.8                            # focal-loss alpha (gamma = 2 hard-coded as a square)
_VMEM_LIMIT = 32 * 1024 * 1024          # raises v5e's 16 MiB default, safe on v6e/v7x


def _cdiv(a, b):
    return -(-a // b)


def _round_up(x, m):
    return _cdiv(x, m) * m


def _make_seg_kernel(tile_r, kc_split, n_rows):
    """Segmentation-loss kernel, closed over the static tiling parameters."""

    def kernel(x_ref, y_ref, out_ref):
        s = pl.program_id(1)            # chunk-axis split (megacore)
        c = pl.program_id(2)            # chunk within split (reduction axis)

        # out_ref is the per-(sample, split) accumulator, resident across c.
        @pl.when(c == 0)
        def _init():
            out_ref[...] = jnp.zeros_like(out_ref)

        gc = s * kc_split + c                    # global chunk index
        valid = n_rows - gc * tile_r             # rows of real data in this chunk

        def accumulate(apply_mask):
            p = x_ref[...].astype(jnp.float32)   # (1, tile_r, 128)
            t = y_ref[...].astype(jnp.float32)
            if apply_mask:
                # Tail / ghost chunk: rows >= valid hold undefined edge-block
                # data (or re-read data for fully-OOB ghost chunks) -> zero
                # them before any math.  p = t = 0 contributes exactly 0 to
                # every partial sum (with the -100 log clamp).
                row = jax.lax.broadcasted_iota(jnp.int32, p.shape, 1)
                keep = row < valid
                p = jnp.where(keep, p, 0.0)
                t = jnp.where(keep, t, 0.0)

            om = 1.0 - p
            logp = jnp.maximum(jnp.log(p), -100.0)      # torch BCELoss clamp
            log1mp = jnp.maximum(jnp.log(om), -100.0)
            bce_el = -(t * (logp - log1mp) + log1mp)
            w = jnp.where(t == 1.0, 1.0, _ALPHA)        # focal alpha weighting
            focal_el = om * om * w * bce_el             # gamma = 2 as a square

            # Reduce over the row (sublane) axis only -> (1, 1, 128) lane rows.
            bce_rows = jnp.sum(bce_el, axis=1, keepdims=True)
            focal_rows = jnp.sum(focal_el, axis=1, keepdims=True)
            inter_rows = jnp.sum(p * t, axis=1, keepdims=True)
            total_rows = jnp.sum(p + t, axis=1, keepdims=True)

            # One sublane per quantity; the 128-lane reduce happens in the
            # wrapper.  Sublanes 4..7 stay zero.
            sub = jax.lax.broadcasted_iota(jnp.int32, out_ref.shape, 2)
            out_ref[...] += (jnp.where(sub == 0, bce_rows, 0.0)
                             + jnp.where(sub == 1, focal_rows, 0.0)
                             + jnp.where(sub == 2, inter_rows, 0.0)
                             + jnp.where(sub == 3, total_rows, 0.0))

        @pl.when(valid >= tile_r)       # full chunk: no masking work
        def _full():
            accumulate(False)

        @pl.when(valid < tile_r)        # tail / ghost chunk: mask rows
        def _tail():
            accumulate(True)

    return kernel


def combo_loss(input1, target1, input2, target2, input3=None, target3=None):
    """input1/target1: (N, C, H, W); input2/target2: (N, K2); input3/target3: (N, K3)."""
    smooth = 1e-6
    N = input1.shape[0]
    D1 = int(np.prod(input1.shape[1:]))

    # (N, R, 128) lane-dense view.  Free reshape when D1 % 128 == 0.
    R = _cdiv(D1, _LANE)
    kc = max(1, _cdiv(R, _MAX_TILE_R))
    tile_r = _round_up(_cdiv(R, kc), _SUB)          # <8 rows of overhang max
    kc_total = _cdiv(R, tile_r)

    # Megacore-friendly split of the chunk axis when N alone can't keep both
    # v7x TensorCores busy (odd / single-sample batches).
    S = 2 if (N % 2 == 1 and kc_total >= 2) else 1
    kc_split = _cdiv(kc_total, S)

    def view(a):
        a = a.reshape(N, D1)
        if D1 % _LANE:
            # Only the sub-lane tail is padded (tiny copy); zeros contribute 0.
            a = jnp.pad(a, ((0, 0), (0, R * _LANE - D1)))
        return a.reshape(N, R, _LANE)

    x1 = view(input1)
    y1 = view(target1)

    def seg_index(n, s, c):
        gc = jnp.minimum(s * kc_split + c, kc_total - 1)   # clamp ghost chunks
        return (n, gc, 0)

    seg_spec = pl.BlockSpec((1, tile_r, _LANE), seg_index)

    kernel = _make_seg_kernel(tile_r, kc_split, R)

    n_seg = N * R * _LANE
    cost = pl.CostEstimate(
        flops=18 * n_seg,
        transcendentals=2 * n_seg,
        bytes_accessed=n_seg * (x1.dtype.itemsize + y1.dtype.itemsize)
        + N * S * _SUB * _LANE * 4,
    )

    out = pl.pallas_call(
        kernel,
        out_shape=jax.ShapeDtypeStruct((N, S, _SUB, _LANE), jnp.float32),
        grid_spec=pltpu.PrefetchScalarGridSpec(
            num_scalar_prefetch=0,
            grid=(N, S, kc_split),
            in_specs=[seg_spec, seg_spec],
            out_specs=pl.BlockSpec((1, 1, _SUB, _LANE),
                                   lambda n, s, c: (n, s, 0, 0)),
        ),
        compiler_params=pltpu.CompilerParams(
            dimension_semantics=("parallel", "parallel", "arbitrary"),
            vmem_limit_bytes=_VMEM_LIMIT),
        cost_estimate=cost,
    )(x1, y1)

    # Cheap O(N) combine of the per-sample partial sums.
    parts = jnp.sum(out, axis=1)                       # (N, 8, 128): fold splits
    denom = jnp.float32(N * D1)
    bce1 = jnp.sum(parts[:, 0, :]) / denom
    focal = jnp.sum(parts[:, 1, :]) / denom
    inter = jnp.sum(parts[:, 2, :], axis=-1)           # (N,)
    total = jnp.sum(parts[:, 3, :], axis=-1)           # (N,)
    iou = (inter + smooth) / (total - inter + smooth)
    iou_loss = 1.0 - jnp.mean(iou)

    # Tiny classification / regression heads: plain JAX (a few KB of work).
    p2 = input2.astype(jnp.float32)
    t2 = target2.astype(jnp.float32)
    bce2 = jnp.mean(-(t2 * jnp.maximum(jnp.log(p2), -100.0)
                      + (1.0 - t2) * jnp.maximum(jnp.log(1.0 - p2), -100.0)))

    loss = 2.0 * bce1 + 1.0 * iou_loss + 2.0 * focal + 2.0 * bce2
    if input3 is not None:
        d = input3.astype(jnp.float32) - target3.astype(jnp.float32)
        loss = loss + 0.005 * jnp.mean(d * d)
    return loss


def _reference(input1, target1, input2, target2, input3, target3):
    # Pure-JAX reference mirroring the PyTorch module (incl. BCELoss log clamp).
    p1 = input1.reshape(input1.shape[0], -1).astype(jnp.float32)
    t1 = target1.reshape(target1.shape[0], -1).astype(jnp.float32)
    bce_el = -(t1 * jnp.maximum(jnp.log(p1), -100.0)
               + (1 - t1) * jnp.maximum(jnp.log(1 - p1), -100.0))
    bce1 = jnp.mean(bce_el)
    fl = (1 - p1) ** 2 * bce_el
    focal = jnp.mean(jnp.where(t1 == 1.0, fl, fl * 0.8))
    inter = jnp.sum(p1 * t1, axis=1)
    total = jnp.sum(p1 + t1, axis=1)
    iou = (inter + 1e-6) / (total - inter + 1e-6)
    iou_loss = 1.0 - jnp.mean(iou)
    bce2 = jnp.mean(-(target2 * jnp.maximum(jnp.log(input2), -100.0)
                      + (1 - target2) * jnp.maximum(jnp.log(1 - input2), -100.0)))
    mse = jnp.mean((input3 - target3) ** 2)
    return 2 * bce1 + 1 * iou_loss + 2 * focal + 2 * bce2 + 0.005 * mse


if __name__ == "__main__":
    key = jax.random.PRNGKey(0)
    k1, k2, k3, k4, k5, k6 = jax.random.split(key, 6)

    N, C, H, W = 2, 4, 16, 16
    K2, K3 = 4, 8

    input1 = jax.nn.sigmoid(jax.random.normal(k1, (N, C, H, W), jnp.float32))
    target1 = (jax.random.uniform(k2, (N, C, H, W)) > 0.5).astype(jnp.float32)
    input2 = jax.nn.sigmoid(jax.random.normal(k3, (N, K2), jnp.float32))
    target2 = (jax.random.uniform(k4, (N, K2)) > 0.5).astype(jnp.float32)
    input3 = jax.random.normal(k5, (N, K3), jnp.float32)
    target3 = jax.random.normal(k6, (N, K3), jnp.float32)

    loss = combo_loss(input1, target1, input2, target2, input3, target3)
    loss = jax.block_until_ready(loss)

    ref = _reference(input1, target1, input2, target2, input3, target3)
    np.testing.assert_allclose(np.asarray(loss), np.asarray(ref), rtol=1e-5, atol=1e-5)

    print("KERNEL_OK")
</pallas_src>

<mosaic_0001>
module attributes {stable_mosaic.version = 11 : i64} {
  func.func @kernel(%arg0: i32, %arg1: i32, %arg2: i32, %arg3: memref<1x8x128xf32, #tpu.memory_space<vmem>>, %arg4: memref<1x8x128xf32, #tpu.memory_space<vmem>>, %arg5: memref<1x1x8x128xf32, #tpu.memory_space<vmem>>) attributes {dimension_semantics = [#tpu.dimension_semantics<parallel>, #tpu.dimension_semantics<parallel>, #tpu.dimension_semantics<arbitrary>], iteration_bounds = array<i64: 2, 1, 1>, scalar_prefetch = 0 : i64, scratch_operands = 0 : i64, tpu.core_type = #tpu.core_type<tc>, window_params = [{transform_indices = @transform_0, window_bounds = array<i64: 1, 8, 128>}, {transform_indices = @transform_1, window_bounds = array<i64: 1, 8, 128>}, {transform_indices = @transform_2, window_bounds = array<i64: 1, 1, 8, 128>}]} {
    %c0_i32 = arith.constant 0 : i32
    %0 = arith.cmpi eq, %arg2, %c0_i32 : i32
    %1 = arith.extui %0 : i1 to i32
    %c0_i32_0 = arith.constant 0 : i32
    %2 = arith.cmpi ne, %1, %c0_i32_0 : i32
    scf.if %2 {
      %cst = arith.constant 0.000000e+00 : f32
      %13 = vector.broadcast %cst : f32 to vector<1x1x8x128xf32>
      %c0 = arith.constant 0 : index
      %c0_6 = arith.constant 0 : index
      %c0_7 = arith.constant 0 : index
      %c0_8 = arith.constant 0 : index
      %14 = vector.load %arg5[%c0, %c0_6, %c0_7, %c0_8] : memref<1x1x8x128xf32, #tpu.memory_space<vmem>>, vector<1x1x8x128xf32>
      tpu.vector_store %arg5[%c0, %c0_6, %c0_7, %c0_8], %13 {strides = array<i32>} : memref<1x1x8x128xf32, #tpu.memory_space<vmem>>, vector<1x1x8x128xf32>,
    } else {
    }
    %c1_i32 = arith.constant 1 : i32
    %3 = arith.muli %arg1, %c1_i32 : i32
    %4 = arith.addi %3, %arg2 : i32
    %c8_i32 = arith.constant 8 : i32
    %5 = arith.muli %4, %c8_i32 : i32
    %c8_i32_1 = arith.constant 8 : i32
    %6 = arith.subi %c8_i32_1, %5 : i32
    %c8_i32_2 = arith.constant 8 : i32
    %7 = arith.cmpi sge, %6, %c8_i32_2 : i32
    %8 = arith.extui %7 : i1 to i32
    %c0_i32_3 = arith.constant 0 : i32
    %9 = arith.cmpi ne, %8, %c0_i32_3 : i32
    scf.if %9 {
      %c0 = arith.constant 0 : index
      %c0_6 = arith.constant 0 : index
      %c0_7 = arith.constant 0 : index
      %13 = vector.load %arg3[%c0, %c0_6, %c0_7] : memref<1x8x128xf32, #tpu.memory_space<vmem>>, vector<1x8x128xf32>
      %c0_8 = arith.constant 0 : index
      %c0_9 = arith.constant 0 : index
      %c0_10 = arith.constant 0 : index
      %14 = vector.load %arg4[%c0_8, %c0_9, %c0_10] : memref<1x8x128xf32, #tpu.memory_space<vmem>>, vector<1x8x128xf32>
      %cst = arith.constant 1.000000e+00 : f32
      %15 = vector.broadcast %cst : f32 to vector<1x8x128xf32>
      %16 = arith.subf %15, %13 : vector<1x8x128xf32>
      %17 = math.log %13 : vector<1x8x128xf32>
      %cst_11 = arith.constant -1.000000e+02 : f32
      %18 = vector.broadcast %cst_11 : f32 to vector<1x8x128xf32>
      %19 = arith.maximumf %17, %18 : vector<1x8x128xf32>
      %20 = math.log %16 : vector<1x8x128xf32>
      %cst_12 = arith.constant -1.000000e+02 : f32
      %21 = vector.broadcast %cst_12 : f32 to vector<1x8x128xf32>
      %22 = arith.maximumf %20, %21 : vector<1x8x128xf32>
      %23 = arith.subf %19, %22 : vector<1x8x128xf32>
      %24 = arith.mulf %14, %23 : vector<1x8x128xf32>
      %25 = arith.addf %24, %22 : vector<1x8x128xf32>
      %cst_13 = arith.constant 0.000000e+00 : f32
      %26 = vector.broadcast %cst_13 : f32 to vector<1x8x128xf32>
      %27 = arith.subf %26, %25 : vector<1x8x128xf32>
      %cst_14 = arith.constant 1.000000e+00 : f32
      %28 = vector.broadcast %cst_14 : f32 to vector<1x8x128xf32>
      %29 = arith.cmpf oeq, %14, %28 : vector<1x8x128xf32>
      %cst_15 = arith.constant 1.000000e+00 : f32
      %cst_16 = arith.constant 8.000000e-01 : f32
      %30 = vector.broadcast %cst_15 : f32 to vector<1x8x128xf32>
      %31 = vector.broadcast %cst_16 : f32 to vector<1x8x128xf32>
      %32 = arith.select %29, %30, %31 : vector<1x8x128xi1>, vector<1x8x128xf32>
      %33 = arith.mulf %16, %16 : vector<1x8x128xf32>
      %34 = arith.mulf %33, %32 : vector<1x8x128xf32>
      %35 = arith.mulf %34, %27 : vector<1x8x128xf32>
      %cst_17 = arith.constant dense<0.000000e+00> : vector<1x128xf32>
      %36 = vector.multi_reduction <add>, %27, %cst_17 [1] : vector<1x8x128xf32> to vector<1x128xf32>
      %37 = vector.shape_cast %36 : vector<1x128xf32> to vector<1x1x128xf32>
      %cst_18 = arith.constant dense<0.000000e+00> : vector<1x128xf32>
      %38 = vector.multi_reduction <add>, %35, %cst_18 [1] : vector<1x8x128xf32> to vector<1x128xf32>
      %39 = vector.shape_cast %38 : vector<1x128xf32> to vector<1x1x128xf32>
      %40 = arith.mulf %13, %14 : vector<1x8x128xf32>
      %cst_19 = arith.constant dense<0.000000e+00> : vector<1x128xf32>
      %41 = vector.multi_reduction <add>, %40, %cst_19 [1] : vector<1x8x128xf32> to vector<1x128xf32>
      %42 = vector.shape_cast %41 : vector<1x128xf32> to vector<1x1x128xf32>
      %43 = arith.addf %13, %14 : vector<1x8x128xf32>
      %cst_20 = arith.constant dense<0.000000e+00> : vector<1x128xf32>
      %44 = vector.multi_reduction <add>, %43, %cst_20 [1] : vector<1x8x128xf32> to vector<1x128xf32>
      %45 = vector.shape_cast %44 : vector<1x128xf32> to vector<1x1x128xf32>
      %46 = tpu.iota {dimensions = array<i32: 2>} : vector<1x1x8x128xi32>
      %c0_21 = arith.constant 0 : index
      %c0_22 = arith.constant 0 : index
      %c0_23 = arith.constant 0 : index
      %c0_24 = arith.constant 0 : index
      %47 = vector.load %arg5[%c0_21, %c0_22, %c0_23, %c0_24] : memref<1x1x8x128xf32, #tpu.memory_space<vmem>>, vector<1x1x8x128xf32>
      %c0_i32_25 = arith.constant 0 : i32
      %48 = vector.broadcast %c0_i32_25 : i32 to vector<1x1x8x128xi32>
      %49 = arith.cmpi eq, %46, %48 : vector<1x1x8x128xi32>
      %cst_26 = arith.constant 0.000000e+00 : f32
      %50 = vector.shape_cast %37 : vector<1x1x128xf32> to vector<1x1x1x128xf32>
      %51 = vector.broadcast %50 : vector<1x1x1x128xf32> to vector<1x1x8x128xf32>
      %52 = vector.broadcast %cst_26 : f32 to vector<1x1x8x128xf32>
      %53 = arith.select %49, %51, %52 : vector<1x1x8x128xi1>, vector<1x1x8x128xf32>
      %c1_i32_27 = arith.constant 1 : i32
      %54 = vector.broadcast %c1_i32_27 : i32 to vector<1x1x8x128xi32>
      %55 = arith.cmpi eq, %46, %54 : vector<1x1x8x128xi32>
      %cst_28 = arith.constant 0.000000e+00 : f32
      %56 = vector.shape_cast %39 : vector<1x1x128xf32> to vector<1x1x1x128xf32>
      %57 = vector.broadcast %56 : vector<1x1x1x128xf32> to vector<1x1x8x128xf32>
      %58 = vector.broadcast %cst_28 : f32 to vector<1x1x8x128xf32>
      %59 = arith.select %55, %57, %58 : vector<1x1x8x128xi1>, vector<1x1x8x128xf32>
      %60 = arith.addf %53, %59 : vector<1x1x8x128xf32>
      %c2_i32 = arith.constant 2 : i32
      %61 = vector.broadcast %c2_i32 : i32 to vector<1x1x8x128xi32>
      %62 = arith.cmpi eq, %46, %61 : vector<1x1x8x128xi32>
      %cst_29 = arith.constant 0.000000e+00 : f32
      %63 = vector.shape_cast %42 : vector<1x1x128xf32> to vector<1x1x1x128xf32>
      %64 = vector.broadcast %63 : vector<1x1x1x128xf32> to vector<1x1x8x128xf32>
      %65 = vector.broadcast %cst_29 : f32 to vector<1x1x8x128xf32>
      %66 = arith.select %62, %64, %65 : vector<1x1x8x128xi1>, vector<1x1x8x128xf32>
      %67 = arith.addf %60, %66 : vector<1x1x8x128xf32>
      %c3_i32 = arith.constant 3 : i32
      %68 = vector.broadcast %c3_i32 : i32 to vector<1x1x8x128xi32>
      %69 = arith.cmpi eq, %46, %68 : vector<1x1x8x128xi32>
      %cst_30 = arith.constant 0.000000e+00 : f32
      %70 = vector.shape_cast %45 : vector<1x1x128xf32> to vector<1x1x1x128xf32>
      %71 = vector.broadcast %70 : vector<1x1x1x128xf32> to vector<1x1x8x128xf32>
      %72 = vector.broadcast %cst_30 : f32 to vector<1x1x8x128xf32>
      %73 = arith.select %69, %71, %72 : vector<1x1x8x128xi1>, vector<1x1x8x128xf32>
      %74 = arith.addf %67, %73 : vector<1x1x8x128xf32>
      %75 = arith.addf %47, %74 : vector<1x1x8x128xf32>
      %c0_31 = arith.constant 0 : index
      %c0_32 = arith.constant 0 : index
      %c0_33 = arith.constant 0 : index
      %c0_34 = arith.constant 0 : index
      %76 = vector.load %arg5[%c0_31, %c0_32, %c0_33, %c0_34] : memref<1x1x8x128xf32, #tpu.memory_space<vmem>>, vector<1x1x8x128xf32>
      tpu.vector_store %arg5[%c0_31, %c0_32, %c0_33, %c0_34], %75 {strides = array<i32>} : memref<1x1x8x128xf32, #tpu.memory_space<vmem>>, vector<1x1x8x128xf32>,
    } else {
    }
    %c8_i32_4 = arith.constant 8 : i32
    %10 = arith.cmpi slt, %6, %c8_i32_4 : i32
    %11 = arith.extui %10 : i1 to i32
    %c0_i32_5 = arith.constant 0 : i32
    %12 = arith.cmpi ne, %11, %c0_i32_5 : i32
    scf.if %12 {
      %c0 = arith.constant 0 : index
      %c0_6 = arith.constant 0 : index
      %c0_7 = arith.constant 0 : index
      %13 = vector.load %arg3[%c0, %c0_6, %c0_7] : memref<1x8x128xf32, #tpu.memory_space<vmem>>, vector<1x8x128xf32>
      %c0_8 = arith.constant 0 : index
      %c0_9 = arith.constant 0 : index
      %c0_10 = arith.constant 0 : index
      %14 = vector.load %arg4[%c0_8, %c0_9, %c0_10] : memref<1x8x128xf32, #tpu.memory_space<vmem>>, vector<1x8x128xf32>
      %15 = tpu.iota {dimensions = array<i32: 1>} : vector<1x8x128xi32>
      %16 = vector.broadcast %6 : i32 to vector<1x8x128xi32>
      %17 = arith.cmpi slt, %15, %16 : vector<1x8x128xi32>
      %cst = arith.constant 0.000000e+00 : f32
      %18 = vector.broadcast %cst : f32 to vector<1x8x128xf32>
      %19 = arith.select %17, %13, %18 : vector<1x8x128xi1>, vector<1x8x128xf32>
      %cst_11 = arith.constant 0.000000e+00 : f32
      %20 = vector.broadcast %cst_11 : f32 to vector<1x8x128xf32>
      %21 = arith.select %17, %14, %20 : vector<1x8x128xi1>, vector<1x8x128xf32>
      %cst_12 = arith.constant 1.000000e+00 : f32
      %22 = vector.broadcast %cst_12 : f32 to vector<1x8x128xf32>
      %23 = arith.subf %22, %19 : vector<1x8x128xf32>
      %24 = math.log %19 : vector<1x8x128xf32>
      %cst_13 = arith.constant -1.000000e+02 : f32
      %25 = vector.broadcast %cst_13 : f32 to vector<1x8x128xf32>
      %26 = arith.maximumf %24, %25 : vector<1x8x128xf32>
      %27 = math.log %23 : vector<1x8x128xf32>
      %cst_14 = arith.constant -1.000000e+02 : f32
      %28 = vector.broadcast %cst_14 : f32 to vector<1x8x128xf32>
      %29 = arith.maximumf %27, %28 : vector<1x8x128xf32>
      %30 = arith.subf %26, %29 : vector<1x8x128xf32>
      %31 = arith.mulf %21, %30 : vector<1x8x128xf32>
      %32 = arith.addf %31, %29 : vector<1x8x128xf32>
      %cst_15 = arith.constant 0.000000e+00 : f32
      %33 = vector.broadcast %cst_15 : f32 to vector<1x8x128xf32>
      %34 = arith.subf %33, %32 : vector<1x8x128xf32>
      %cst_16 = arith.constant 1.000000e+00 : f32
      %35 = vector.broadcast %cst_16 : f32 to vector<1x8x128xf32>
      %36 = arith.cmpf oeq, %21, %35 : vector<1x8x128xf32>
      %cst_17 = arith.constant 1.000000e+00 : f32
      %cst_18 = arith.constant 8.000000e-01 : f32
      %37 = vector.broadcast %cst_17 : f32 to vector<1x8x128xf32>
      %38 = vector.broadcast %cst_18 : f32 to vector<1x8x128xf32>
      %39 = arith.select %36, %37, %38 : vector<1x8x128xi1>, vector<1x8x128xf32>
      %40 = arith.mulf %23, %23 : vector<1x8x128xf32>
      %41 = arith.mulf %40, %39 : vector<1x8x128xf32>
      %42 = arith.mulf %41, %34 : vector<1x8x128xf32>
      %cst_19 = arith.constant dense<0.000000e+00> : vector<1x128xf32>
      %43 = vector.multi_reduction <add>, %34, %cst_19 [1] : vector<1x8x128xf32> to vector<1x128xf32>
      %44 = vector.shape_cast %43 : vector<1x128xf32> to vector<1x1x128xf32>
      %cst_20 = arith.constant dense<0.000000e+00> : vector<1x128xf32>
      %45 = vector.multi_reduction <add>, %42, %cst_20 [1] : vector<1x8x128xf32> to vector<1x128xf32>
      %46 = vector.shape_cast %45 : vector<1x128xf32> to vector<1x1x128xf32>
      %47 = arith.mulf %19, %21 : vector<1x8x128xf32>
      %cst_21 = arith.constant dense<0.000000e+00> : vector<1x128xf32>
      %48 = vector.multi_reduction <add>, %47, %cst_21 [1] : vector<1x8x128xf32> to vector<1x128xf32>
      %49 = vector.shape_cast %48 : vector<1x128xf32> to vector<1x1x128xf32>
      %50 = arith.addf %19, %21 : vector<1x8x128xf32>
      %cst_22 = arith.constant dense<0.000000e+00> : vector<1x128xf32>
      %51 = vector.multi_reduction <add>, %50, %cst_22 [1] : vector<1x8x128xf32> to vector<1x128xf32>
      %52 = vector.shape_cast %51 : vector<1x128xf32> to vector<1x1x128xf32>
      %53 = tpu.iota {dimensions = array<i32: 2>} : vector<1x1x8x128xi32>
      %c0_23 = arith.constant 0 : index
      %c0_24 = arith.constant 0 : index
      %c0_25 = arith.constant 0 : index
      %c0_26 = arith.constant 0 : index
      %54 = vector.load %arg5[%c0_23, %c0_24, %c0_25, %c0_26] : memref<1x1x8x128xf32, #tpu.memory_space<vmem>>, vector<1x1x8x128xf32>
      %c0_i32_27 = arith.constant 0 : i32
      %55 = vector.broadcast %c0_i32_27 : i32 to vector<1x1x8x128xi32>
      %56 = arith.cmpi eq, %53, %55 : vector<1x1x8x128xi32>
      %cst_28 = arith.constant 0.000000e+00 : f32
      %57 = vector.shape_cast %44 : vector<1x1x128xf32> to vector<1x1x1x128xf32>
      %58 = vector.broadcast %57 : vector<1x1x1x128xf32> to vector<1x1x8x128xf32>
      %59 = vector.broadcast %cst_28 : f32 to vector<1x1x8x128xf32>
      %60 = arith.select %56, %58, %59 : vector<1x1x8x128xi1>, vector<1x1x8x128xf32>
      %c1_i32_29 = arith.constant 1 : i32
      %61 = vector.broadcast %c1_i32_29 : i32 to vector<1x1x8x128xi32>
      %62 = arith.cmpi eq, %53, %61 : vector<1x1x8x128xi32>
      %cst_30 = arith.constant 0.000000e+00 : f32
      %63 = vector.shape_cast %46 : vector<1x1x128xf32> to vector<1x1x1x128xf32>
      %64 = vector.broadcast %63 : vector<1x1x1x128xf32> to vector<1x1x8x128xf32>
      %65 = vector.broadcast %cst_30 : f32 to vector<1x1x8x128xf32>
      %66 = arith.select %62, %64, %65 : vector<1x1x8x128xi1>, vector<1x1x8x128xf32>
      %67 = arith.addf %60, %66 : vector<1x1x8x128xf32>
      %c2_i32 = arith.constant 2 : i32
      %68 = vector.broadcast %c2_i32 : i32 to vector<1x1x8x128xi32>
      %69 = arith.cmpi eq, %53, %68 : vector<1x1x8x128xi32>
      %cst_31 = arith.constant 0.000000e+00 : f32
      %70 = vector.shape_cast %49 : vector<1x1x128xf32> to vector<1x1x1x128xf32>
      %71 = vector.broadcast %70 : vector<1x1x1x128xf32> to vector<1x1x8x128xf32>
      %72 = vector.broadcast %cst_31 : f32 to vector<1x1x8x128xf32>
      %73 = arith.select %69, %71, %72 : vector<1x1x8x128xi1>, vector<1x1x8x128xf32>
      %74 = arith.addf %67, %73 : vector<1x1x8x128xf32>
      %c3_i32 = arith.constant 3 : i32
      %75 = vector.broadcast %c3_i32 : i32 to vector<1x1x8x128xi32>
      %76 = arith.cmpi eq, %53, %75 : vector<1x1x8x128xi32>
      %cst_32 = arith.constant 0.000000e+00 : f32
      %77 = vector.shape_cast %52 : vector<1x1x128xf32> to vector<1x1x1x128xf32>
      %78 = vector.broadcast %77 : vector<1x1x1x128xf32> to vector<1x1x8x128xf32>
      %79 = vector.broadcast %cst_32 : f32 to vector<1x1x8x128xf32>
      %80 = arith.select %76, %78, %79 : vector<1x1x8x128xi1>, vector<1x1x8x128xf32>
      %81 = arith.addf %74, %80 : vector<1x1x8x128xf32>
      %82 = arith.addf %54, %81 : vector<1x1x8x128xf32>
      %c0_33 = arith.constant 0 : index
      %c0_34 = arith.constant 0 : index
      %c0_35 = arith.constant 0 : index
      %c0_36 = arith.constant 0 : index
      %83 = vector.load %arg5[%c0_33, %c0_34, %c0_35, %c0_36] : memref<1x1x8x128xf32, #tpu.memory_space<vmem>>, vector<1x1x8x128xf32>
      tpu.vector_store %arg5[%c0_33, %c0_34, %c0_35, %c0_36], %82 {strides = array<i32>} : memref<1x1x8x128xf32, #tpu.memory_space<vmem>>, vector<1x1x8x128xf32>,
    } else {
    }
    return
  }
  func.func @transform_0(%arg0: i32, %arg1: i32, %arg2: i32) -> (i32, i32, i32) {
    %c1_i32 = arith.constant 1 : i32
    %0 = arith.muli %arg1, %c1_i32 : i32
    %1 = arith.addi %0, %arg2 : i32
    %c0_i32 = arith.constant 0 : i32
    %2 = arith.minsi %1, %c0_i32 : i32
    %c0_i32_0 = arith.constant 0 : i32
    %c0_i32_1 = arith.constant 0 : i32
    return %arg0, %2, %c0_i32_0 : i32, i32, i32
  }
  func.func @transform_1(%arg0: i32, %arg1: i32, %arg2: i32) -> (i32, i32, i32) {
    %c1_i32 = arith.constant 1 : i32
    %0 = arith.muli %arg1, %c1_i32 : i32
    %1 = arith.addi %0, %arg2 : i32
    %c0_i32 = arith.constant 0 : i32
    %2 = arith.minsi %1, %c0_i32 : i32
    %c0_i32_0 = arith.constant 0 : i32
    %c0_i32_1 = arith.constant 0 : i32
    return %arg0, %2, %c0_i32_0 : i32, i32, i32
  }
  func.func @transform_2(%arg0: i32, %arg1: i32, %arg2: i32) -> (i32, i32, i32, i32) {
    %c0_i32 = arith.constant 0 : i32
    %c0_i32_0 = arith.constant 0 : i32
    %c0_i32_1 = arith.constant 0 : i32
    return %arg0, %arg1, %c0_i32, %c0_i32_0 : i32, i32, i32, i32
  }
}

</mosaic_0001>

<llo_original>
// kernel: tpu_custom_call.1
$region0: #{tpu_custom_call.1}
  #allocation0 [shape = 'u32[]', space=smem, size = 0x4, offset = 0x4, fixed_abs, tag = 'smem constant byte address 0x4 - core index']
  #allocation1 [shape = 'u32[144,128]{1,0:T(1,128)}', space=vmem, size = 0x12000, scoped, tag = 'internal scratch']
  %s0 = inlined_call_operand.hbm [shape: f32[2,8,128], index: 0, kind: input, shape index: {}]
  %s1 = inlined_call_operand.hbm [shape: f32[2,8,128], index: 1, kind: input, shape index: {}]
  %s2 = inlined_call_operand.hbm [shape: f32[2,1,8,128], index: 2, kind: output, shape index: {}]
  %s3 = sld [smem:[#allocation0]]
  $region61: #{tpu_custom_call.1} parent=0
    _
  %s5 = ssub.s32 1, %s3
  %s6 = scalar_select 0, %s5, %s3
  $region1: #{tpu_custom_call.1} parent=0
    #allocation2 [shape = 'u8[8192]{0}', space=vmem, size = 0x2000, scoped, tag = 'input window, operand 0']
    #allocation3 [shape = 's32[2]{0}', space=sflag, size = 0x8, scoped, tag = 'scoped memory for tpu_custom_call.1']
    #allocation4 [shape = 's32[2]{0}', space=sflag, size = 0x8, scoped, tag = 'scoped memory for tpu_custom_call.1']
    #allocation5 [shape = 'u8[8192]{0}', space=vmem, size = 0x2000, scoped, tag = 'input window, operand 1']
    #allocation6 [shape = 's32[2]{0}', space=sflag, size = 0x8, scoped, tag = 'scoped memory for tpu_custom_call.1']
    #allocation7 [shape = 'u8[8192]{0}', space=vmem, size = 0x2000, scoped, tag = 'output window, operand 0']
    %7 = vsyncpa [#allocation3], 0
    %s8 = scalar_lea.sflag [#allocation3], 1
    %9 = vsyncpa %s8, 0
    %10 = vsyncpa [#allocation6], 0
    %s11 = scalar_lea.sflag [#allocation6], 1
    %12 = vsyncpa %s11, 0
    %13 = vsyncpa [#allocation4], 0
    %s14 = scalar_lea.sflag [#allocation4], 1
    %15 = vsyncpa %s14, 0
    loop: start=0, step=1, limit=4
    $region2: #{tpu_custom_call.1} parent=1 // loop_pre_header
      _
    $region3: #{tpu_custom_call.1} parent=1 // loop_header
      %s17 = sphi 0, %s21
      %p18 = scmp.ge.s32.totalorder %s17, 4
      %s24 = sphi 0, %s43
      %s25 = sphi 0, %s39
      %s26 = sphi 0, %s35
      %s27 = sphi 0, %s24
      %s28 = sphi 0, %s25
      %s29 = sphi 0, %s26
      %s30 = sphi 0, %s27
      %s31 = sphi 0, %s28
      %s32 = sphi 0, %s29
      %s54 = sphi 0, %s56
      %s57 = sphi 0, %s54
      %s58 = sphi 0, %s57
      %s74 = sphi 0, %s58
      %s88 = sphi 0, %s90
      %s91 = sphi 0, %s88
      %s92 = sphi 0, %s91
      %s108 = sphi 0, %s92
      %s116 = sphi 0, %s118
      %s119 = sphi 0, %s116
      %s120 = sphi 0, %s119
      %s136 = sphi 0, %s120
    $region4: #{tpu_custom_call.1} parent=1 // loop_header_branch
      %20 = sbr.rel (%p18) target = $region8
    $region5: #{tpu_custom_call.1} parent=1 // loop_body
      %s22 = ssub.s32 %s17, 1
      %s23 = ssub.s32 %s17, 2
      %s33 = sadd.s32 1, %s26
      %p34 = scmp.ge.s32.totalorder %s33, 1
      %s35 = scalar_select %p34, 0, %s33
      %s36 = sadd.s32 1, %s25
      %s37 = scalar_select %p34, %s36, %s25
      %p38 = scmp.ge.s32.totalorder %s37, 1
      %s39 = scalar_select %p38, 0, %s37
      %s40 = sadd.s32 1, %s24
      %s41 = scalar_select %p38, %s40, %s24
      %p42 = scmp.ge.s32.totalorder %s41, 2
      %s43 = scalar_select %p42, 0, %s41
      %s44 = sadd.s32 %s25, %s26
      %p45 = scmp.lt.s32.totalorder %s44, 0
      %s46 = scalar_select %p45, %s44, 0
      %s47 = sadd.s32 %s39, %s35
      %p48 = scmp.lt.s32.totalorder %s47, 0
      %s49 = scalar_select %p48, %s47, 0
      %s50 = ssub.s32 %s24, %s43
      %s51 = ssub.s32 %s46, %s49
      %s52 = sor.u32 %s50, %s51
      %p53 = scmp.eq.s32.totalorder %s52, 0
      %s55 = sadd.s32 %s54, 1
      %s56 = scalar_select %p53, %s54, %s55
      %p59 = pneg %p53
      %p60 = scmp.eq.s32.totalorder %s17, 1
      %p61 = por %p59, %p60
      %p62 = scmp.ne.s32.totalorder %s54, %s57
      %p63 = scmp.eq.s32.totalorder %s17, 0
      %p64 = por %p62, %p63
      %p65 = scmp.ne.s32.totalorder %s54, %s57
      %p66 = scmp.eq.s32.totalorder %s22, 1
      %p67 = por %p65, %p66
      %p68 = scmp.ne.s32.totalorder %s57, %s58
      %p69 = scmp.eq.s32.totalorder %s22, 0
      %p70 = por %p68, %p69
      %p71 = scmp.ne.s32.totalorder %s57, %s58
      %p72 = scmp.eq.s32.totalorder %s23, 1
      %p73 = por %p71, %p72
      %p75 = scmp.ne.s32.totalorder %s58, %s74
      %p76 = scmp.eq.s32.totalorder %s23, 0
      %p77 = por %p75, %p76
      %s78 = sadd.s32 %s25, %s26
      %p79 = scmp.lt.s32.totalorder %s78, 0
      %s80 = scalar_select %p79, %s78, 0
      %s81 = sadd.s32 %s39, %s35
      %p82 = scmp.lt.s32.totalorder %s81, 0
      %s83 = scalar_select %p82, %s81, 0
      %s84 = ssub.s32 %s24, %s43
      %s85 = ssub.s32 %s80, %s83
      %s86 = sor.u32 %s84, %s85
      %p87 = scmp.eq.s32.totalorder %s86, 0
      %s89 = sadd.s32 %s88, 1
      %s90 = scalar_select %p87, %s88, %s89
      %p93 = pneg %p87
      %p94 = scmp.eq.s32.totalorder %s17, 1
      %p95 = por %p93, %p94
      %p96 = scmp.ne.s32.totalorder %s88, %s91
      %p97 = scmp.eq.s32.totalorder %s17, 0
      %p98 = por %p96, %p97
      %p99 = scmp.ne.s32.totalorder %s88, %s91
      %p100 = scmp.eq.s32.totalorder %s22, 1
      %p101 = por %p99, %p100
      %p102 = scmp.ne.s32.totalorder %s91, %s92
      %p103 = scmp.eq.s32.totalorder %s22, 0
      %p104 = por %p102, %p103
      %p105 = scmp.ne.s32.totalorder %s91, %s92
      %p106 = scmp.eq.s32.totalorder %s23, 1
      %p107 = por %p105, %p106
      %p109 = scmp.ne.s32.totalorder %s92, %s108
      %p110 = scmp.eq.s32.totalorder %s23, 0
      %p111 = por %p109, %p110
      %s112 = ssub.s32 %s24, %s43
      %s113 = ssub.s32 %s25, %s39
      %s114 = sor.u32 %s112, %s113
      %p115 = scmp.eq.s32.totalorder %s114, 0
      %s117 = sadd.s32 %s116, 1
      %s118 = scalar_select %p115, %s116, %s117
      %p121 = pneg %p115
      %p122 = scmp.eq.s32.totalorder %s17, 1
      %p123 = por %p121, %p122
      %p124 = scmp.ne.s32.totalorder %s116, %s119
      %p125 = scmp.eq.s32.totalorder %s17, 0
      %p126 = por %p124, %p125
      %p127 = scmp.ne.s32.totalorder %s116, %s119
      %p128 = scmp.eq.s32.totalorder %s22, 1
      %p129 = por %p127, %p128
      %p130 = scmp.ne.s32.totalorder %s119, %s120
      %p131 = scmp.eq.s32.totalorder %s22, 0
      %p132 = por %p130, %p131
      %p133 = scmp.ne.s32.totalorder %s119, %s120
      %p134 = scmp.eq.s32.totalorder %s23, 1
      %p135 = por %p133, %p134
      %p137 = scmp.ne.s32.totalorder %s120, %s136
      %p138 = scmp.eq.s32.totalorder %s23, 0
      %p139 = por %p137, %p138
      %p140 = scmp.le.s32.totalorder 1, %s17
      %p141 = scmp.lt.s32.totalorder %s17, 3
      %p142 = pnand %p140, %p141
      %p143 = pneg %p142
      // Predicated region
      $region9: #{tpu_custom_call.1} parent=5 // pred_check
        _
      $region10: #{tpu_custom_call.1} parent=5 // pred_check_branch
        %145 = sbr.rel (%p142) target = $region12
      $region11: #{tpu_custom_call.1} parent=5 // pred_region
        %s146 = ssub.s32 %s17, 1
      $region12: #{tpu_custom_call.1} parent=5 // pred_fallthru
        _
      %p147 = scmp.lt.s32.totalorder %s17, 2
      // Predicated region
      $region13: #{tpu_custom_call.1} parent=5 // pred_check
        %p148 = pneg %p147
      $region14: #{tpu_custom_call.1} parent=5 // pred_check_branch
        %150 = sbr.rel (%p148) target = $region16
      $region15: #{tpu_custom_call.1} parent=5 // pred_region
        // Predicated region
        $region17: #{tpu_custom_call.1} parent=15 // pred_check
          %p151 = pneg %p64
        $region18: #{tpu_custom_call.1} parent=15 // pred_check_branch
          %153 = sbr.rel (%p151) target = $region20
        $region19: #{tpu_custom_call.1} parent=15 // pred_region
          %s154 = sand.u32 %s54, 1
          %s155 = scalar_lea.sflag [#allocation3], %s154
          %s156 = sand.u32 %s54, 1
          %s157 = smul.addr %s156, 8
          %s158 = scalar_lea.vmem [#allocation2], %s157
          %s159 = sadd.s32 %s25, %s26
          %p160 = scmp.lt.s32.totalorder %s159, 0
          %s161 = scalar_select %p160, %s159, 0
          %s163 = ssub.s32 128, 128
          %164 = vsyncadd %s155, %s163
          %s165 = sadd.s32 %s161, %s24
          %s166 = smul.addr %s165, 128
          %s167 = scalar_lea.hbm %s0, %s166
          %s169 = sshll.u32 %s158, 4
          %s170 = int_to_ptr.vmem [resolvable:$true] %s169
          %172 = dma.hbm_to_vmem [thread:$0]  %s167, 128, %s170, %s155
        $region20: #{tpu_custom_call.1} parent=15 // pred_fallthru
          _
        // Predicated region
        $region21: #{tpu_custom_call.1} parent=15 // pred_check
          %p173 = pneg %p98
        $region22: #{tpu_custom_call.1} parent=15 // pred_check_branch
          %175 = sbr.rel (%p173) target = $region24
        $region23: #{tpu_custom_call.1} parent=15 // pred_region
          %s176 = sand.u32 %s88, 1
          %s177 = scalar_lea.sflag [#allocation6], %s176
          %s178 = sand.u32 %s88, 1
          %s179 = smul.addr %s178, 8
          %s180 = scalar_lea.vmem [#allocation5], %s179
          %s181 = sadd.s32 %s25, %s26
          %p182 = scmp.lt.s32.totalorder %s181, 0
          %s183 = scalar_select %p182, %s181, 0
          %s185 = ssub.s32 128, 128
          %186 = vsyncadd %s177, %s185
          %s187 = sadd.s32 %s183, %s24
          %s188 = smul.addr %s187, 128
          %s189 = scalar_lea.hbm %s1, %s188
          %s191 = sshll.u32 %s180, 4
          %s192 = int_to_ptr.vmem [resolvable:$true] %s191
          %194 = dma.hbm_to_vmem [thread:$0]  %s189, 128, %s192, %s177
        $region24: #{tpu_custom_call.1} parent=15 // pred_fallthru
          _
      $region16: #{tpu_custom_call.1} parent=5 // pred_fallthru
        _
      %p195 = scmp.le.s32.totalorder 1, %s17
      %p196 = scmp.lt.s32.totalorder %s17, 3
      %p197 = pnand %p195, %p196
      %p198 = pneg %p197
      // Predicated region
      $region25: #{tpu_custom_call.1} parent=5 // pred_check
        _
      $region26: #{tpu_custom_call.1} parent=5 // pred_check_branch
        %200 = sbr.rel (%p197) target = $region28
      $region27: #{tpu_custom_call.1} parent=5 // pred_region
        %s201 = ssub.s32 %s17, 1
        %s202 = sand.u32 %s57, 1
        %s203 = scalar_lea.sflag [#allocation3], %s202
        %s204 = sand.u32 %s57, 1
        %s205 = smul.addr %s204, 8
        %s206 = scalar_lea.vmem [#allocation2], %s205
        // Predicated region
        $region29: #{tpu_custom_call.1} parent=27 // pred_check
          %p207 = pneg %p70
        $region30: #{tpu_custom_call.1} parent=27 // pred_check_branch
          %209 = sbr.rel (%p207) target = $region32
        $region31: #{tpu_custom_call.1} parent=27 // pred_region
          %210 = dma.done %s203, 128
        $region32: #{tpu_custom_call.1} parent=27 // pred_fallthru
          _
        %s211 = sand.u32 %s91, 1
        %s212 = scalar_lea.sflag [#allocation6], %s211
        %s213 = sand.u32 %s91, 1
        %s214 = smul.addr %s213, 8
        %s215 = scalar_lea.vmem [#allocation5], %s214
        // Predicated region
        $region33: #{tpu_custom_call.1} parent=27 // pred_check
          %p216 = pneg %p104
        $region34: #{tpu_custom_call.1} parent=27 // pred_check_branch
          %218 = sbr.rel (%p216) target = $region36
        $region35: #{tpu_custom_call.1} parent=27 // pred_region
          %219 = dma.done %s212, 128
        $region36: #{tpu_custom_call.1} parent=27 // pred_fallthru
          _
        %s220 = sand.u32 %s57, 1
        %s221 = scalar_lea.sflag [#allocation3], %s220
        %s222 = sand.u32 %s57, 1
        %s223 = smul.addr %s222, 8
        %s224 = scalar_lea.vmem [#allocation2], %s223
        %p225 = pneg %p70
        %p226 = pneg %p67
        %s227 = sand.u32 %s91, 1
        %s228 = scalar_lea.sflag [#allocation6], %s227
        %s229 = sand.u32 %s91, 1
        %s230 = smul.addr %s229, 8
        %s231 = scalar_lea.vmem [#allocation5], %s230
        %p232 = pneg %p104
        %p233 = pneg %p101
        %p234 = pneg %p132
        %p235 = pneg %p129
        %s236 = sand.u32 %s119, 1
        %s237 = scalar_lea.sflag [#allocation4], %s236
        %s238 = sand.u32 %s119, 1
        %s239 = smul.addr %s238, 8
        %s240 = scalar_lea.vmem [#allocation7], %s239
        %s241 = sadd.s32 %s28, %s29
        %p242 = scmp.lt.s32.totalorder %s241, 0
        %s243 = scalar_select %p242, %s241, 0
        %s244 = sadd.s32 %s28, %s29
        %p245 = scmp.lt.s32.totalorder %s244, 0
        %s246 = scalar_select %p245, %s244, 0
        %p247 = scmp.eq.s32.totalorder %s29, 0
        // Predicated region
        $region37: #{tpu_custom_call.1} parent=27 // pred_check
          %p248 = pneg %p247
        $region38: #{tpu_custom_call.1} parent=27 // pred_check_branch
          %250 = sbr.rel (%p248) target = $region40
        $region39: #{tpu_custom_call.1} parent=27 // pred_region
          %251 = vst [vmem:[%s240] sm:$0xff] 0.0
        $region40: #{tpu_custom_call.1} parent=27 // pred_fallthru
          _
        %s252 = sadd.s32 %s28, %s29
        %s253 = smul.u32 %s252, 8
        %s254 = ssub.s32 8, %s253
        %p255 = scmp.ge.s32.totalorder %s254, 8
        // Predicated region
        $region41: #{tpu_custom_call.1} parent=27 // pred_check
          %p256 = pneg %p255
        $region42: #{tpu_custom_call.1} parent=27 // pred_check_branch
          %258 = sbr.rel (%p256) target = $region44
        $region43: #{tpu_custom_call.1} parent=27 // pred_region
          %v259 = vld [vmem:[%s206] sm:$0xff]
          %v260 = vld [vmem:[%s215] sm:$0xff]
          %v261 = vsub.f32 1.0, %v259
          %v262 = vlog2.pop %v259
          %v263 = vmul.f32 %v262, 0.6931472
          %v264 = vmax.f32 %v263, -100.0
          %v265 = vlog2.pop %v261
          %v266 = vmul.f32 %v265, 0.6931472
          %v267 = vmax.f32 %v266, -100.0
          %v268 = vsub.f32 %v264, %v267
          %v269 = vmul.f32 %v260, %v268
          %v270 = vadd.f32 %v269, %v267
          %v271 = vsub.f32 0.0, %v270
          %vm272 = vcmp.eq.f32.partialorder %v260, 1.0
          %v273 = vsel %vm272, 1.0, 0.8
          %v274 = vmul.f32 %v261, %v261
          %v275 = vmul.f32 %v274, %v273
          %v276 = vmul.f32 %v275, %v271
          %v277 = vrot.slane %v271, 4
          %v278 = vadd.f32 %v271, %v277
          %v279 = vrot.slane %v278, 2
          %v280 = vadd.f32 %v278, %v279
          %v281 = vrot.slane %v280, 1
          %v282 = vadd.f32 %v280, %v281
          %v283 = vrot.slane %v276, 4
          %v284 = vadd.f32 %v276, %v283
          %v285 = vrot.slane %v284, 2
          %v286 = vadd.f32 %v284, %v285
          %v287 = vrot.slane %v286, 1
          %v288 = vadd.f32 %v286, %v287
          %v289 = vmul.f32 %v259, %v260
          %v290 = vrot.slane %v289, 4
          %v291 = vadd.f32 %v289, %v290
          %v292 = vrot.slane %v291, 2
          %v293 = vadd.f32 %v291, %v292
          %v294 = vrot.slane %v293, 1
          %v295 = vadd.f32 %v293, %v294
          %v296 = vadd.f32 %v259, %v260
          %v297 = vrot.slane %v296, 4
          %v298 = vadd.f32 %v296, %v297
          %v299 = vrot.slane %v298, 2
          %v300 = vadd.f32 %v298, %v299
          %v301 = vrot.slane %v300, 1
          %v302 = vadd.f32 %v300, %v301
          %v303 = vlaneseq
          %v304 = vshrl.u32 %v303, 7
          %v305 = vld [vmem:[%s240] sm:$0xff]
          %vm306 = vcmp.eq.s32.totalorder %v304, 0
          %v307 = vsel %vm306, %v282, 0.0
          %vm308 = vcmp.eq.s32.totalorder %v304, 1
          %v309 = vsel %vm308, %v288, 0.0
          %v310 = vadd.f32 %v307, %v309
          %vm311 = vcmp.eq.s32.totalorder %v304, 2
          %v312 = vsel %vm311, %v295, 0.0
          %v313 = vadd.f32 %v310, %v312
          %vm314 = vcmp.eq.s32.totalorder %v304, 3
          %v315 = vsel %vm314, %v302, 0.0
          %v316 = vadd.f32 %v313, %v315
          %v317 = vadd.f32 %v305, %v316
          %318 = vst [vmem:[%s240] sm:$0xff] %v317
        $region44: #{tpu_custom_call.1} parent=27 // pred_fallthru
          _
        %p319 = scmp.lt.s32.totalorder %s254, 8
        // Predicated region
        $region45: #{tpu_custom_call.1} parent=27 // pred_check
          %p320 = pneg %p319
        $region46: #{tpu_custom_call.1} parent=27 // pred_check_branch
          %322 = sbr.rel (%p320) target = $region48
        $region47: #{tpu_custom_call.1} parent=27 // pred_region
          %v323 = vld [vmem:[%s206] sm:$0xff]
          %v324 = vld [vmem:[%s215] sm:$0xff]
          %v325 = vlaneseq
          %v326 = vshrl.u32 %v325, 7
          %v327 = vstv %s254
          %vm328 = vcmp.lt.s32.totalorder %v326, %v327
          %v329 = vsel %vm328, %v323, 0.0
          %v330 = vsel %vm328, %v324, 0.0
          %v331 = vsub.f32 1.0, %v329
          %v332 = vlog2.pop %v329
          %v333 = vmul.f32 %v332, 0.6931472
          %v334 = vmax.f32 %v333, -100.0
          %v335 = vlog2.pop %v331
          %v336 = vmul.f32 %v335, 0.6931472
          %v337 = vmax.f32 %v336, -100.0
          %v338 = vsub.f32 %v334, %v337
          %v339 = vmul.f32 %v330, %v338
          %v340 = vadd.f32 %v339, %v337
          %v341 = vsub.f32 0.0, %v340
          %vm342 = vcmp.eq.f32.partialorder %v330, 1.0
          %v343 = vsel %vm342, 1.0, 0.8
          %v344 = vmul.f32 %v331, %v331
          %v345 = vmul.f32 %v344, %v343
          %v346 = vmul.f32 %v345, %v341
          %v347 = vrot.slane %v341, 4
          %v348 = vadd.f32 %v341, %v347
          %v349 = vrot.slane %v348, 2
          %v350 = vadd.f32 %v348, %v349
          %v351 = vrot.slane %v350, 1
          %v352 = vadd.f32 %v350, %v351
          %v353 = vrot.slane %v346, 4
          %v354 = vadd.f32 %v346, %v353
          %v355 = vrot.slane %v354, 2
          %v356 = vadd.f32 %v354, %v355
          %v357 = vrot.slane %v356, 1
          %v358 = vadd.f32 %v356, %v357
          %v359 = vmul.f32 %v329, %v330
          %v360 = vrot.slane %v359, 4
          %v361 = vadd.f32 %v359, %v360
          %v362 = vrot.slane %v361, 2
          %v363 = vadd.f32 %v361, %v362
          %v364 = vrot.slane %v363, 1
          %v365 = vadd.f32 %v363, %v364
          %v366 = vadd.f32 %v329, %v330
          %v367 = vrot.slane %v366, 4
          %v368 = vadd.f32 %v366, %v367
          %v369 = vrot.slane %v368, 2
          %v370 = vadd.f32 %v368, %v369
          %v371 = vrot.slane %v370, 1
          %v372 = vadd.f32 %v370, %v371
          %v373 = vld [vmem:[%s240] sm:$0xff]
          %vm374 = vcmp.eq.s32.totalorder %v326, 0
          %v375 = vsel %vm374, %v352, 0.0
          %vm376 = vcmp.eq.s32.totalorder %v326, 1
          %v377 = vsel %vm376, %v358, 0.0
          %v378 = vadd.f32 %v375, %v377
          %vm379 = vcmp.eq.s32.totalorder %v326, 2
          %v380 = vsel %vm379, %v365, 0.0
          %v381 = vadd.f32 %v378, %v380
          %vm382 = vcmp.eq.s32.totalorder %v326, 3
          %v383 = vsel %vm382, %v372, 0.0
          %v384 = vadd.f32 %v381, %v383
          %v385 = vadd.f32 %v373, %v384
          %386 = vst [vmem:[%s240] sm:$0xff] %v385
        $region48: #{tpu_custom_call.1} parent=27 // pred_fallthru
          _
        %s387 = sand.u32 %s119, 1
        %s388 = scalar_lea.sflag [#allocation4], %s387
        %s389 = sand.u32 %s119, 1
        %s390 = smul.addr %s389, 8
        %s391 = scalar_lea.vmem [#allocation7], %s390
        // Predicated region
        $region49: #{tpu_custom_call.1} parent=27 // pred_check
          %p392 = pneg %p129
        $region50: #{tpu_custom_call.1} parent=27 // pred_check_branch
          %394 = sbr.rel (%p392) target = $region52
        $region51: #{tpu_custom_call.1} parent=27 // pred_region
          %s396 = ssub.s32 128, 128
          %397 = vsyncadd %s388, %s396
          %s398 = sadd.s32 %s28, %s27
          %s399 = smul.addr %s398, 128
          %s400 = scalar_lea.hbm %s2, %s399
          %s402 = sshll.u32 %s391, 4
          %s403 = int_to_ptr.vmem [resolvable:$true] %s402
          %405 = dma.vmem_to_hbm [thread:$0]  %s403, 128, %s400, %s388
        $region52: #{tpu_custom_call.1} parent=27 // pred_fallthru
          _
      $region28: #{tpu_custom_call.1} parent=5 // pred_fallthru
        _
      %p406 = scmp.le.s32.totalorder 2, %s17
      // Predicated region
      $region53: #{tpu_custom_call.1} parent=5 // pred_check
        %p407 = pneg %p406
      $region54: #{tpu_custom_call.1} parent=5 // pred_check_branch
        %409 = sbr.rel (%p407) target = $region56
      $region55: #{tpu_custom_call.1} parent=5 // pred_region
        %s410 = ssub.s32 %s17, 2
        // Predicated region
        $region57: #{tpu_custom_call.1} parent=55 // pred_check
          %p411 = pneg %p135
        $region58: #{tpu_custom_call.1} parent=55 // pred_check_branch
          %413 = sbr.rel (%p411) target = $region60
        $region59: #{tpu_custom_call.1} parent=55 // pred_region
          %s414 = sand.u32 %s120, 1
          %s415 = scalar_lea.sflag [#allocation4], %s414
          %s416 = sand.u32 %s120, 1
          %s417 = smul.addr %s416, 8
          %s418 = scalar_lea.vmem [#allocation7], %s417
          %419 = dma.done %s415, 128
        $region60: #{tpu_custom_call.1} parent=55 // pred_fallthru
          _
      $region56: #{tpu_custom_call.1} parent=5 // pred_fallthru
        _
    $region6: #{tpu_custom_call.1} parent=1 // loop_footer
      %s21 = sadd.s32 1, %s17
    $region7: #{tpu_custom_call.1} parent=1 // loop_footer_branch
      %16 = sbr.rel target = $region3
    $region8: #{tpu_custom_call.1} parent=1 // loop_exit
      _
    %420 = vsyncpa [#allocation3], 1
    %s421 = scalar_lea.sflag [#allocation3], 1
    %422 = vsyncpa %s421, 1
    %423 = vsyncpa [#allocation6], 1
    %s424 = scalar_lea.sflag [#allocation6], 1
    %425 = vsyncpa %s424, 1
    %426 = vsyncpa [#allocation4], 1
    %s427 = scalar_lea.sflag [#allocation4], 1
    %428 = vsyncpa %s427, 1

</llo_original>
